<compile_context>
chip_gen: v7x
topology: tpu7x:2x2x1
jax: 0.10.0
libtpu: 0.0.40
codegen_flags: <defaults>
</compile_context>

<pallas_src>
import jax
import jax.numpy as jnp
from jax.experimental import pallas as pl
from jax.experimental.pallas import tpu as pltpu

TILE_N = 512  # lane-dense batch tile (multiple of 128); (H, TILE_N) f32 = 64 KiB


def mlp_kernel(x_ref, p_ref, b2_ref, o_ref):
    # x_ref : (1, TILE_N)  VMEM -- batch chunk on the lane axis (lane-dense)
    # p_ref : (H, 3)       VMEM -- columns: [w1, b1, w2], resident across grid
    # b2_ref: (1, 1)       SMEM -- output bias as a scalar
    # o_ref : (1, TILE_N)  VMEM -- lane-dense output chunk
    x = x_ref[...]                       # (1, TILE_N)
    w1 = p_ref[:, 0:1]                   # (H, 1)
    b1 = p_ref[:, 1:2]                   # (H, 1)
    w2 = p_ref[:, 2:3]                   # (H, 1)

    # Hidden layer: outer product on the VPU (no MXU push/drain for K=1).
    h = w1 * x + b1                      # (H, TILE_N)

    # sigmoid(h) = 0.5*tanh(0.5*h) + 0.5: a single EUP transcendental, exact.
    h = 0.5 * jnp.tanh(0.5 * h) + 0.5

    # Output layer: VPU multiply + XLU sublane reduce (N=1 matmul avoided),
    # then add the SMEM scalar bias via the cheap sreg->vreg broadcast.
    y = jnp.sum(w2 * h, axis=0, keepdims=True) + b2_ref[0, 0]   # (1, TILE_N)
    o_ref[...] = y.astype(o_ref.dtype)


def prepare_params(w1, b1, w2, b2):
    """One-time packing of PyTorch-layout weights (call once, reuse per forward).

    w1: (H, 1); b1: (H,); w2: (1, H); b2: (1,)  ->  ((H, 3) f32, (1, 1) f32)
    """
    h_dim, f = w1.shape
    o_dim, h2 = w2.shape
    assert f == 1, "kernel specialized for n_feature == 1"
    assert o_dim == 1 and h2 == h_dim, "kernel specialized for n_output == 1"
    packed = jnp.stack(
        [w1[:, 0].astype(jnp.float32),
         b1.astype(jnp.float32),
         w2[0, :].astype(jnp.float32)],
        axis=1)                                            # (H, 3)
    b2_s = b2.reshape(1, 1).astype(jnp.float32)            # (1, 1) SMEM scalar
    return packed, b2_s


@jax.jit
def net_forward(x, packed, b2_s):
    """x: (N, 1) f32; packed: (H, 3); b2_s: (1, 1). Returns (N, 1)."""
    n, f = x.shape
    h_dim = packed.shape[0]
    assert f == 1

    # Batch on the lane axis, padded to a multiple of TILE_N (single pad op).
    npad = pl.cdiv(n, TILE_N) * TILE_N
    x_lane = jnp.pad(x[:, 0].astype(jnp.float32)[None, :], ((0, 0), (0, npad - n)))

    grid = (npad // TILE_N,)
    out = pl.pallas_call(
        mlp_kernel,
        out_shape=jax.ShapeDtypeStruct((1, npad), jnp.float32),
        grid=grid,
        in_specs=[
            # Batch chunk: double-buffered lane-dense tile.
            pl.BlockSpec((1, TILE_N), lambda i: (0, i)),
            # Packed weights: constant index_map -> stays resident in VMEM.
            pl.BlockSpec((h_dim, 3), lambda i: (0, 0)),
            # Output bias as an SMEM scalar.
            pl.BlockSpec((1, 1), lambda i: (0, 0),
                         memory_space=pltpu.MemorySpace.SMEM),
        ],
        out_specs=pl.BlockSpec((1, TILE_N), lambda i: (0, i)),
        compiler_params=pltpu.CompilerParams(
            dimension_semantics=("parallel",)),   # shard batch tiles on v7x
    )(x_lane, packed, b2_s)

    # Back to the PyTorch-facing (N, 1) shape; drop the padded lanes.
    return out[0, :n].reshape(n, 1)


def init_params(key, n_feature, n_hidden, n_output):
    # PyTorch nn.Linear-style uniform(-1/sqrt(fan_in), 1/sqrt(fan_in)) init,
    # stored in PyTorch layout: weight (out, in), bias (out,).
    k1, k2, k3, k4 = jax.random.split(key, 4)
    bound1 = 1.0 / jnp.sqrt(jnp.float32(n_feature))
    bound2 = 1.0 / jnp.sqrt(jnp.float32(n_hidden))
    w1 = jax.random.uniform(k1, (n_hidden, n_feature), jnp.float32, -bound1, bound1)
    b1 = jax.random.uniform(k2, (n_hidden,), jnp.float32, -bound1, bound1)
    w2 = jax.random.uniform(k3, (n_output, n_hidden), jnp.float32, -bound2, bound2)
    b2 = jax.random.uniform(k4, (n_output,), jnp.float32, -bound2, bound2)
    return w1, b1, w2, b2


if __name__ == "__main__":
    # Shapes implied by the script: x = linspace(-2, 2, 100).unsqueeze(1) -> (100, 1)
    n_feature, n_hidden, n_output = 1, 32, 1
    batch = 100

    x = jnp.linspace(-2.0, 2.0, batch, dtype=jnp.float32).reshape(batch, 1)
    key = jax.random.PRNGKey(0)
    w1, b1, w2, b2 = init_params(key, n_feature, n_hidden, n_output)

    # One-time parameter packing (hoisted out of the per-call path).
    packed, b2_s = prepare_params(w1, b1, w2, b2)

    out = net_forward(x, packed, b2_s)
    jax.block_until_ready(out)

    # Reference in plain JAX, identical math to the PyTorch forward.
    h_ref = jax.nn.sigmoid(x @ w1.T + b1[None, :])
    ref = h_ref @ w2.T + b2[None, :]

    assert out.shape == (batch, n_output)
    # Exact sigmoid (tanh form) -> tight tolerance.
    assert jnp.allclose(out, ref, atol=1e-5, rtol=1e-5)

    print("KERNEL_OK")
</pallas_src>

<mosaic_0001>
module attributes {stable_mosaic.version = 11 : i64} {
  func.func @mlp_kernel(%arg0: i32, %arg1: memref<1x512xf32, #tpu.memory_space<vmem>>, %arg2: memref<32x3xf32, #tpu.memory_space<vmem>>, %arg3: memref<1x1xf32, #tpu.memory_space<smem>>, %arg4: memref<1x512xf32, #tpu.memory_space<vmem>>) attributes {dimension_semantics = [#tpu.dimension_semantics<parallel>], iteration_bounds = array<i64: 1>, scalar_prefetch = 0 : i64, scratch_operands = 0 : i64, tpu.core_type = #tpu.core_type<tc>, window_params = [{transform_indices = @transform_0, window_bounds = array<i64: 1, 512>}, {pipeline_mode = #tpu.pipeline_mode<synchronous>, transform_indices = @transform_1, window_bounds = array<i64: 32, 3>}, {transform_indices = @transform_2, window_bounds = array<i64: 1, 1>}, {transform_indices = @transform_3, window_bounds = array<i64: 1, 512>}]} {
    %c0 = arith.constant 0 : index
    %c0_0 = arith.constant 0 : index
    %0 = vector.load %arg1[%c0, %c0_0] : memref<1x512xf32, #tpu.memory_space<vmem>>, vector<1x512xf32>
    %c0_1 = arith.constant 0 : index
    %c0_2 = arith.constant 0 : index
    %1 = vector.load %arg2[%c0_1, %c0_2] : memref<32x3xf32, #tpu.memory_space<vmem>>, vector<32x1xf32>
    %c0_3 = arith.constant 0 : index
    %c1 = arith.constant 1 : index
    %2 = vector.load %arg2[%c0_3, %c1] : memref<32x3xf32, #tpu.memory_space<vmem>>, vector<32x1xf32>
    %c0_4 = arith.constant 0 : index
    %c2 = arith.constant 2 : index
    %3 = vector.load %arg2[%c0_4, %c2] : memref<32x3xf32, #tpu.memory_space<vmem>>, vector<32x1xf32>
    %4 = vector.broadcast %1 : vector<32x1xf32> to vector<32x512xf32>
    %5 = vector.broadcast %0 : vector<1x512xf32> to vector<32x512xf32>
    %6 = arith.mulf %4, %5 : vector<32x512xf32>
    %7 = vector.broadcast %2 : vector<32x1xf32> to vector<32x512xf32>
    %8 = arith.addf %6, %7 : vector<32x512xf32>
    %cst = arith.constant 5.000000e-01 : f32
    %9 = vector.broadcast %cst : f32 to vector<32x512xf32>
    %10 = arith.mulf %9, %8 : vector<32x512xf32>
    %11 = math.tanh %10 : vector<32x512xf32>
    %cst_5 = arith.constant 5.000000e-01 : f32
    %12 = vector.broadcast %cst_5 : f32 to vector<32x512xf32>
    %13 = arith.mulf %12, %11 : vector<32x512xf32>
    %cst_6 = arith.constant 5.000000e-01 : f32
    %14 = vector.broadcast %cst_6 : f32 to vector<32x512xf32>
    %15 = arith.addf %13, %14 : vector<32x512xf32>
    %16 = vector.broadcast %3 : vector<32x1xf32> to vector<32x512xf32>
    %17 = arith.mulf %16, %15 : vector<32x512xf32>
    %cst_7 = arith.constant dense<0.000000e+00> : vector<512xf32>
    %18 = vector.multi_reduction <add>, %17, %cst_7 [0] : vector<32x512xf32> to vector<512xf32>
    %19 = vector.shape_cast %18 : vector<512xf32> to vector<1x512xf32>
    %c0_8 = arith.constant 0 : index
    %c0_9 = arith.constant 0 : index
    %20 = memref.load %arg3[%c0_8, %c0_9] : memref<1x1xf32, #tpu.memory_space<smem>>
    %21 = vector.broadcast %20 : f32 to vector<1x512xf32>
    %22 = arith.addf %19, %21 : vector<1x512xf32>
    %c0_10 = arith.constant 0 : index
    %c0_11 = arith.constant 0 : index
    %23 = vector.load %arg4[%c0_10, %c0_11] : memref<1x512xf32, #tpu.memory_space<vmem>>, vector<1x512xf32>
    tpu.vector_store %arg4[%c0_10, %c0_11], %22 {strides = array<i32>} : memref<1x512xf32, #tpu.memory_space<vmem>>, vector<1x512xf32>,
    return
  }
  func.func @transform_0(%arg0: i32) -> (i32, i32) {
    %c0_i32 = arith.constant 0 : i32
    %c0_i32_0 = arith.constant 0 : i32
    return %c0_i32, %arg0 : i32, i32
  }
  func.func @transform_1(%arg0: i32) -> (i32, i32) {
    %c0_i32 = arith.constant 0 : i32
    %c0_i32_0 = arith.constant 0 : i32
    %c0_i32_1 = arith.constant 0 : i32
    return %c0_i32, %c0_i32_0 : i32, i32
  }
  func.func @transform_2(%arg0: i32) -> (i32, i32) {
    %c0_i32 = arith.constant 0 : i32
    %c0_i32_0 = arith.constant 0 : i32
    %c0_i32_1 = arith.constant 0 : i32
    return %c0_i32, %c0_i32_0 : i32, i32
  }
  func.func @transform_3(%arg0: i32) -> (i32, i32) {
    %c0_i32 = arith.constant 0 : i32
    %c0_i32_0 = arith.constant 0 : i32
    return %c0_i32, %arg0 : i32, i32
  }
}

</mosaic_0001>

<llo_original>
// kernel: net_forward.1
$region0: #{net_forward.1}
  #allocation0 [shape = 'u32[]', space=smem, size = 0x4, offset = 0x4, fixed_abs, tag = 'smem constant byte address 0x4 - core index']
  #allocation1 [shape = 'u32[144,128]{1,0:T(1,128)}', space=vmem, size = 0x12000, scoped, tag = 'internal scratch']
  #allocation2 [shape = 'f32[1,1]{1,0:T(1,128)S(6)}', space=smem, size = 0x200, scoped, tag = 'scoped memory for net_forward.1']
  %s0 = inlined_call_operand.vmem [shape: f32[1,512], index: 0, kind: input, shape index: {}]
  %s1 = inlined_call_operand.vmem [shape: f32[32,3], index: 1, kind: input, shape index: {}]
  %s2 = inlined_call_operand.<no memory space> [shape: f32[1,1], index: 2, kind: input, shape index: {}]
  %s3 = inlined_call_operand.vmem [shape: f32[1,512], index: 3, kind: output, shape index: {}]
  %s4 = sld [smem:[#allocation0]]
  $region22: #{net_forward.1} parent=0
    _
  %s6 = ssub.s32 1, %s4
  %s7 = scalar_select 0, %s6, %s4
  %8 = sst [smem:[#allocation2]] %s2
  // Predicated region
  $region2: #{net_forward.1} parent=0 // pred_check
    _
  $region3: #{net_forward.1} parent=0 // pred_check_branch
    %10 = sbr.rel (0) target = $region5
  $region4: #{net_forward.1} parent=0 // pred_region
    _
  $region5: #{net_forward.1} parent=0 // pred_fallthru
    _
  // Predicated region
  $region6: #{net_forward.1} parent=0 // pred_check
    _
  $region7: #{net_forward.1} parent=0 // pred_check_branch
    %12 = sbr.rel (0) target = $region9
  $region8: #{net_forward.1} parent=0 // pred_region
    _
  $region9: #{net_forward.1} parent=0 // pred_fallthru
    _
  // Predicated region
  $region10: #{net_forward.1} parent=0 // pred_check
    _
  $region11: #{net_forward.1} parent=0 // pred_check_branch
    %14 = sbr.rel (0) target = $region13
  $region12: #{net_forward.1} parent=0 // pred_region
    _
  $region13: #{net_forward.1} parent=0 // pred_fallthru
    _
  %v15 = vld [vmem:[%s0] sm:$0xf]
  %v16 = vld [vmem:[%s1] sm:$0xff]
  %v17 = vld [vmem:[%s1 + $0x8] sm:$0xff]
  %v18 = vld [vmem:[%s1 + $0x10] sm:$0xff]
  %v19 = vld [vmem:[%s1 + $0x18] sm:$0xff]
  %21 = vset.pattern.permute.xlu0 0
  %22 = vperm.xlu0 %21, %v16
  %v23 = vpop.permute.xlu0 %22
  %26 = vset.pattern.permute.xlu0 0
  %27 = vperm.xlu0 %26, %v17
  %v28 = vpop.permute.xlu0 %27
  %31 = vset.pattern.permute.xlu0 0
  %32 = vperm.xlu0 %31, %v18
  %v33 = vpop.permute.xlu0 %32
  %36 = vset.pattern.permute.xlu0 0
  %37 = vperm.xlu0 %36, %v19
  %v38 = vpop.permute.xlu0 %37
  %v41 = vlaneseq
  %v42 = vshrl.u32 %v41, 7
  %v43 = vsub.s32 0, %v42
  %v44 = vrot.slane %v15, %v43
  %v45 = vlaneseq
  %v46 = vshrl.u32 %v45, 7
  %v47 = vsub.s32 1, %v46
  %v48 = vrot.slane %v15, %v47
  %v49 = vlaneseq
  %v50 = vshrl.u32 %v49, 7
  %v51 = vsub.s32 2, %v50
  %v52 = vrot.slane %v15, %v51
  %v53 = vlaneseq
  %v54 = vshrl.u32 %v53, 7
  %v55 = vsub.s32 3, %v54
  %v56 = vrot.slane %v15, %v55
  %v61 = vmul.f32 %v23, %v44
  %v62 = vmul.f32 %v23, %v48
  %v63 = vmul.f32 %v23, %v52
  %v64 = vmul.f32 %v23, %v56
  %v65 = vmul.f32 %v28, %v44
  %v66 = vmul.f32 %v28, %v48
  %v67 = vmul.f32 %v28, %v52
  %v68 = vmul.f32 %v28, %v56
  %v69 = vmul.f32 %v33, %v44
  %v70 = vmul.f32 %v33, %v48
  %v71 = vmul.f32 %v33, %v52
  %v72 = vmul.f32 %v33, %v56
  %v73 = vmul.f32 %v38, %v44
  %v74 = vmul.f32 %v38, %v48
  %v75 = vmul.f32 %v38, %v52
  %v76 = vmul.f32 %v38, %v56
  %77 = vset.pattern.permute.xlu0 1
  %78 = vperm.xlu0 %77, %v16
  %v79 = vpop.permute.xlu0 %78
  %81 = vset.pattern.permute.xlu0 1
  %82 = vperm.xlu0 %81, %v17
  %v83 = vpop.permute.xlu0 %82
  %85 = vset.pattern.permute.xlu0 1
  %86 = vperm.xlu0 %85, %v18
  %v87 = vpop.permute.xlu0 %86
  %89 = vset.pattern.permute.xlu0 1
  %90 = vperm.xlu0 %89, %v19
  %v91 = vpop.permute.xlu0 %90
  %v93 = vadd.f32 %v61, %v79
  %v94 = vadd.f32 %v62, %v79
  %v95 = vadd.f32 %v63, %v79
  %v96 = vadd.f32 %v64, %v79
  %v97 = vadd.f32 %v65, %v83
  %v98 = vadd.f32 %v66, %v83
  %v99 = vadd.f32 %v67, %v83
  %v100 = vadd.f32 %v68, %v83
  %v101 = vadd.f32 %v69, %v87
  %v102 = vadd.f32 %v70, %v87
  %v103 = vadd.f32 %v71, %v87
  %v104 = vadd.f32 %v72, %v87
  %v105 = vadd.f32 %v73, %v91
  %v106 = vadd.f32 %v74, %v91
  %v107 = vadd.f32 %v75, %v91
  %v108 = vadd.f32 %v76, %v91
  %v109 = vmul.f32 %v93, 0.5
  %v110 = vmul.f32 %v94, 0.5
  %v111 = vmul.f32 %v95, 0.5
  %v112 = vmul.f32 %v96, 0.5
  %v113 = vmul.f32 %v97, 0.5
  %v114 = vmul.f32 %v98, 0.5
  %v115 = vmul.f32 %v99, 0.5
  %v116 = vmul.f32 %v100, 0.5
  %v117 = vmul.f32 %v101, 0.5
  %v118 = vmul.f32 %v102, 0.5
  %v119 = vmul.f32 %v103, 0.5
  %v120 = vmul.f32 %v104, 0.5
  %v121 = vmul.f32 %v105, 0.5
  %v122 = vmul.f32 %v106, 0.5
  %v123 = vmul.f32 %v107, 0.5
  %v124 = vmul.f32 %v108, 0.5
  %v125 = vtanh.pop %v109
  %v126 = vtanh.pop %v110
  %v127 = vtanh.pop %v111
  %v128 = vtanh.pop %v112
  %v129 = vtanh.pop %v113
  %v130 = vtanh.pop %v114
  %v131 = vtanh.pop %v115
  %v132 = vtanh.pop %v116
  %v133 = vtanh.pop %v117
  %v134 = vtanh.pop %v118
  %v135 = vtanh.pop %v119
  %v136 = vtanh.pop %v120
  %v137 = vtanh.pop %v121
  %v138 = vtanh.pop %v122
  %v139 = vtanh.pop %v123
  %v140 = vtanh.pop %v124
  %v141 = vmul.f32 %v125, 0.5
  %v142 = vmul.f32 %v126, 0.5
  %v143 = vmul.f32 %v127, 0.5
  %v144 = vmul.f32 %v128, 0.5
  %v145 = vmul.f32 %v129, 0.5
  %v146 = vmul.f32 %v130, 0.5
  %v147 = vmul.f32 %v131, 0.5
  %v148 = vmul.f32 %v132, 0.5
  %v149 = vmul.f32 %v133, 0.5
  %v150 = vmul.f32 %v134, 0.5
  %v151 = vmul.f32 %v135, 0.5
  %v152 = vmul.f32 %v136, 0.5
  %v153 = vmul.f32 %v137, 0.5
  %v154 = vmul.f32 %v138, 0.5
  %v155 = vmul.f32 %v139, 0.5
  %v156 = vmul.f32 %v140, 0.5
  %v157 = vadd.f32 %v141, 0.5
  %v158 = vadd.f32 %v142, 0.5
  %v159 = vadd.f32 %v143, 0.5
  %v160 = vadd.f32 %v144, 0.5
  %v161 = vadd.f32 %v145, 0.5
  %v162 = vadd.f32 %v146, 0.5
  %v163 = vadd.f32 %v147, 0.5
  %v164 = vadd.f32 %v148, 0.5
  %v165 = vadd.f32 %v149, 0.5
  %v166 = vadd.f32 %v150, 0.5
  %v167 = vadd.f32 %v151, 0.5
  %v168 = vadd.f32 %v152, 0.5
  %v169 = vadd.f32 %v153, 0.5
  %v170 = vadd.f32 %v154, 0.5
  %v171 = vadd.f32 %v155, 0.5
  %v172 = vadd.f32 %v156, 0.5
  %173 = vset.pattern.permute.xlu0 2
  %174 = vperm.xlu0 %173, %v16
  %v175 = vpop.permute.xlu0 %174
  %177 = vset.pattern.permute.xlu0 2
  %178 = vperm.xlu0 %177, %v17
  %v179 = vpop.permute.xlu0 %178
  %181 = vset.pattern.permute.xlu0 2
  %182 = vperm.xlu0 %181, %v18
  %v183 = vpop.permute.xlu0 %182
  %185 = vset.pattern.permute.xlu0 2
  %186 = vperm.xlu0 %185, %v19
  %v187 = vpop.permute.xlu0 %186
  %v189 = vmul.f32 %v175, %v157
  %v190 = vmul.f32 %v175, %v158
  %v191 = vmul.f32 %v175, %v159
  %v192 = vmul.f32 %v175, %v160
  %v193 = vmul.f32 %v179, %v161
  %v194 = vmul.f32 %v179, %v162
  %v195 = vmul.f32 %v179, %v163
  %v196 = vmul.f32 %v179, %v164
  %v197 = vmul.f32 %v183, %v165
  %v198 = vmul.f32 %v183, %v166
  %v199 = vmul.f32 %v183, %v167
  %v200 = vmul.f32 %v183, %v168
  %v201 = vmul.f32 %v187, %v169
  %v202 = vmul.f32 %v187, %v170
  %v203 = vmul.f32 %v187, %v171
  %v204 = vmul.f32 %v187, %v172
  %v205 = vadd.f32 %v189, %v193
  %v206 = vadd.f32 %v205, %v197
  %v207 = vadd.f32 %v206, %v201
  %v208 = vrot.slane %v207, 4
  %v209 = vadd.f32 %v207, %v208
  %v210 = vrot.slane %v209, 2
  %v211 = vadd.f32 %v209, %v210
  %v212 = vrot.slane %v211, 1
  %v213 = vadd.f32 %v211, %v212
  %v214 = vadd.f32 %v190, %v194
  %v215 = vadd.f32 %v214, %v198
  %v216 = vadd.f32 %v215, %v202
  %v217 = vrot.slane %v216, 4
  %v218 = vadd.f32 %v216, %v217
  %v219 = vrot.slane %v218, 2
  %v220 = vadd.f32 %v218, %v219
  %v221 = vrot.slane %v220, 1
  %v222 = vadd.f32 %v220, %v221
  %v223 = vadd.f32 %v191, %v195
  %v224 = vadd.f32 %v223, %v199
  %v225 = vadd.f32 %v224, %v203
  %v226 = vrot.slane %v225, 4
  %v227 = vadd.f32 %v225, %v226
  %v228 = vrot.slane %v227, 2
  %v229 = vadd.f32 %v227, %v228
  %v230 = vrot.slane %v229, 1
  %v231 = vadd.f32 %v229, %v230
  %v232 = vadd.f32 %v192, %v196
  %v233 = vadd.f32 %v232, %v200
  %v234 = vadd.f32 %v233, %v204
  %v235 = vrot.slane %v234, 4
  %v236 = vadd.f32 %v234, %v235
  %v237 = vrot.slane %v236, 2
  %v238 = vadd.f32 %v236, %v237
  %v239 = vrot.slane %v238, 1
  %v240 = vadd.f32 %v238, %v239
  %s241 = sld [smem:[#allocation2]]
  %v242 = vstv %s241
  %v243 = vadd.f32 %v213, %v242
  %v244 = vadd.f32 %v222, %v242
  %v245 = vadd.f32 %v231, %v242
  %v246 = vadd.f32 %v240, %v242
  %v251 = vcombine.low %v243, %v244
  %v252 = vcombine.low %v245, %v246
  %v254 = vunpack.c.l.s4 1966171168
  %v255 = vunpack.c.0.s8 %v254
  %v256 = vlaneseq
  %v257 = vshrl.u32 %v256, 7
  %v258 = vsub.s32 %v255, %v257
  %v259 = vrot.slane %v251, %v258
  %v261 = vunpack.c.l.s4 1966171168
  %v262 = vunpack.c.0.s8 %v261
  %v263 = vlaneseq
  %v264 = vshrl.u32 %v263, 7
  %v265 = vsub.s32 %v262, %v264
  %v266 = vrot.slane %v252, %v265
  %v267 = vcombine.low %v259, %v266
  %v269 = vunpack.c.l.s4 1966171168
  %v270 = vunpack.c.0.s8 %v269
  %v271 = vlaneseq
  %v272 = vshrl.u32 %v271, 7
  %v273 = vsub.s32 %v270, %v272
  %v274 = vrot.slane %v267, %v273
  %v276 = vlaneseq
  %vm277 = vcmp.ge.s32.totalorder %v276, 0
  %vm278 = vcmp.lt.s32.totalorder %v276, 512
  %vm279 = vmand %vm277, %vm278
  %280 = vst.msk [vmem:[%s3] sm:$0xf] %vm279, %v274
  // Predicated region
  $region14: #{net_forward.1} parent=0 // pred_check
    _
  $region15: #{net_forward.1} parent=0 // pred_check_branch
    %282 = sbr.rel (0) target = $region17
  $region16: #{net_forward.1} parent=0 // pred_region
    _
  $region17: #{net_forward.1} parent=0 // pred_fallthru
    _
  // Predicated region
  $region18: #{net_forward.1} parent=0 // pred_check
    _
  $region19: #{net_forward.1} parent=0 // pred_check_branch
    %284 = sbr.rel (0) target = $region21
  $region20: #{net_forward.1} parent=0 // pred_region
    _
  $region21: #{net_forward.1} parent=0 // pred_fallthru
    _

</llo_original>
